<compile_context>
chip_gen: v5e
topology: v5e:2x2
jax: 0.10.0
libtpu: 0.0.40
codegen_flags: <defaults>
</compile_context>

<pallas_src>
import math
import functools

import jax
import jax.numpy as jnp
from jax import lax
from jax.experimental import pallas as pl
from jax.experimental.pallas import tpu as pltpu


@functools.lru_cache(maxsize=None)
def _vmem_limit_bytes():
    """Per-generation scoped-VMEM budget with ~25% headroom."""
    try:
        cap = int(pltpu.get_tpu_info().vmem_capacity_bytes)
    except Exception:
        cap = 128 * 1024 * 1024
    return max(32 * 1024 * 1024, (cap * 3) // 4)


def _pick_tile(dim, target, align):
    """Largest multiple of `align` <= target that evenly divides `dim`.

    Falls back to the full dimension when dim <= target or no aligned divisor
    exists (a full-extent block is always legal for BlockSpec)."""
    if dim <= target:
        return dim
    t = (target // align) * align
    while t >= align:
        if dim % t == 0:
            return t
        t -= align
    # TODO(synk): for huge non-divisible dims this full-dim fallback can exceed
    # the VMEM budget; a padded/masked tail path would be needed.
    return dim


# ----------------------------------------------------------------------------
# Kernel 1: fused, weight-stationary Q/K/V projection
#   q = xq @ Wq + bq ; k = xk @ Wk + bk ; v = xv @ Wv + bv
# The (3, E, N) weight / (3, 1, N) bias blocks have constant index maps, so
# they are DMA'd into VMEM exactly once and stay resident across all M tiles.
# ----------------------------------------------------------------------------
def _qkv_proj_kernel(*refs, num_x):
    x_refs = refs[:num_x]
    w_ref = refs[num_x]          # (3, E, N)
    b_ref = refs[num_x + 1]      # (3, 1, N)
    out_refs = refs[num_x + 2:]  # 3 x (tm, N)

    xs = [r[...] for r in x_refs]           # load each activation tile once
    for p, o_ref in enumerate(out_refs):
        x = xs[p % num_x]                    # num_x==1 -> shared self-attn input
        o_ref[...] = (
            jnp.dot(x, w_ref[p], preferred_element_type=jnp.float32) + b_ref[p]
        ).astype(o_ref.dtype)


def qkv_projection(xs, w_stack, b_stack, *, tm=512):
    """xs: list of 1 (shared) or 3 (distinct) (M, E) activations.
    w_stack: (3, E, N), b_stack: (3, 1, N) -> (q, k, v) each (M, N)."""
    num_x = len(xs)
    M, E = xs[0].shape
    P, _, N = w_stack.shape
    tm = _pick_tile(M, tm, 8)
    out_dtype = xs[0].dtype
    kernel = functools.partial(_qkv_proj_kernel, num_x=num_x)

    in_specs = (
        [pl.BlockSpec((tm, E), lambda i: (i, 0)) for _ in range(num_x)]
        + [pl.BlockSpec((P, E, N), lambda i: (0, 0, 0)),   # weight-stationary
           pl.BlockSpec((P, 1, N), lambda i: (0, 0, 0))]   # bias-stationary
    )
    out_specs = tuple(pl.BlockSpec((tm, N), lambda i: (i, 0)) for _ in range(P))
    out_shape = tuple(jax.ShapeDtypeStruct((M, N), out_dtype) for _ in range(P))

    return pl.pallas_call(
        kernel,
        out_shape=out_shape,
        grid=(M // tm,),
        in_specs=in_specs,
        out_specs=out_specs,
        compiler_params=pltpu.CompilerParams(
            dimension_semantics=("parallel",),
            vmem_limit_bytes=_vmem_limit_bytes()),
    )(*xs, w_stack, b_stack)


# ----------------------------------------------------------------------------
# Kernel 2: KV-tiled online-softmax (flash) multi-head attention on the packed
# (B, S, H*Dh) layout.  Grid = (B, S//tq, S//tkv); the KV axis is "arbitrary"
# with running max / sum / context accumulators in VMEM scratch, so full-S K/V
# never has to be resident.  The 1/sqrt(Dh) scale is pre-folded into Wq.
# ----------------------------------------------------------------------------
def _mha_flash_kernel(q_ref, k_ref, v_ref, m_ref, o_ref,
                      m_sc, l_sc, acc_sc, *, num_heads, head_size):
    # q_ref: (1, tq, H*Dh)  k_ref/v_ref: (1, tkv, H*Dh)  m_ref: (1, 1, tkv)
    # o_ref: (1, tq, H*Dh)
    # m_sc/l_sc: (tq, H) f32   acc_sc: (tq, H*Dh) f32
    kj = pl.program_id(2)

    @pl.when(kj == 0)
    def _():
        m_sc[...] = jnp.full_like(m_sc, -jnp.inf)
        l_sc[...] = jnp.zeros_like(l_sc)
        acc_sc[...] = jnp.zeros_like(acc_sc)

    mask = m_ref[0]                               # (1, tkv) additive key mask
    # Static head loop (small H).  TODO(synk): for large H use lax.fori_loop
    # with pl.ds slices to bound vreg live ranges.
    for h in range(num_heads):
        lo, hi = h * head_size, (h + 1) * head_size
        qh = q_ref[0, :, lo:hi]                   # (tq, Dh); scale folded into Wq
        kh = k_ref[0, :, lo:hi]                   # (tkv, Dh)
        vh = v_ref[0, :, lo:hi]                   # (tkv, Dh)

        # Q @ K^T as a contraction on the last dims (no explicit transpose).
        s = lax.dot_general(qh, kh, (((1,), (1,)), ((), ())),
                            preferred_element_type=jnp.float32)
        s = s + mask                              # (tq, tkv)

        m_prev = m_sc[:, h:h + 1]                 # (tq, 1)
        m_new = jnp.maximum(m_prev, jnp.max(s, axis=-1, keepdims=True))
        alpha = jnp.exp(m_prev - m_new)
        p = jnp.exp(s - m_new)                    # unnormalized probs

        l_sc[:, h:h + 1] = alpha * l_sc[:, h:h + 1] + jnp.sum(
            p, axis=-1, keepdims=True)
        acc_sc[:, lo:hi] = alpha * acc_sc[:, lo:hi] + jnp.dot(
            p.astype(v_ref.dtype), vh, preferred_element_type=jnp.float32)
        m_sc[:, h:h + 1] = m_new

    @pl.when(kj == pl.num_programs(2) - 1)
    def _():
        # Normalize AFTER the PV matmul: (tq, Dh) work instead of (tq, S), and
        # the reciprocal is exact (acts on a (tq, 1) column -> essentially free).
        for h in range(num_heads):
            lo, hi = h * head_size, (h + 1) * head_size
            inv = 1.0 / l_sc[:, h:h + 1]
            acc_sc[:, lo:hi] = acc_sc[:, lo:hi] * inv
        # Single lane-dense full-width store of the merged context layer.
        o_ref[0] = acc_sc[...].astype(o_ref.dtype)


def attention(q, k, v, mask_b1s, num_heads, head_size, *, tq=256, tkv=512):
    """q, k, v: (B, S, H*Dh) packed; mask_b1s: (B, 1, S) additive -> (B, S, H*Dh)."""
    B, S, HD = q.shape
    tq = _pick_tile(S, tq, 8)
    tkv = _pick_tile(S, tkv, 128)
    kernel = functools.partial(_mha_flash_kernel, num_heads=num_heads,
                               head_size=head_size)
    return pl.pallas_call(
        kernel,
        out_shape=jax.ShapeDtypeStruct((B, S, HD), q.dtype),
        grid=(B, S // tq, S // tkv),
        in_specs=[
            pl.BlockSpec((1, tq, HD), lambda b, qi, kj: (b, qi, 0)),
            pl.BlockSpec((1, tkv, HD), lambda b, qi, kj: (b, kj, 0)),
            pl.BlockSpec((1, tkv, HD), lambda b, qi, kj: (b, kj, 0)),
            pl.BlockSpec((1, 1, tkv), lambda b, qi, kj: (b, 0, kj)),
        ],
        out_specs=pl.BlockSpec((1, tq, HD), lambda b, qi, kj: (b, qi, 0)),
        scratch_shapes=[
            pltpu.VMEM((tq, num_heads), jnp.float32),   # running max  m
            pltpu.VMEM((tq, num_heads), jnp.float32),   # running sum  l
            pltpu.VMEM((tq, HD), jnp.float32),          # running context acc
        ],
        compiler_params=pltpu.CompilerParams(
            dimension_semantics=("parallel", "parallel", "arbitrary"),
            vmem_limit_bytes=_vmem_limit_bytes()),
    )(q, k, v, mask_b1s)


# ----------------------------------------------------------------------------
# Module wrapper (matches the torch forward semantics exactly)
# ----------------------------------------------------------------------------
class MultiHeadAttentionPallas:
    def __init__(self, embedding_size, hidden_size, num_attention_heads, key,
                 mxu_dtype=None):
        assert hidden_size % num_attention_heads == 0
        self.num_heads = num_attention_heads
        self.head_size = hidden_size // num_attention_heads
        self.hidden_size = hidden_size
        # Optional bf16 MXU-input mode (recommended on v6e/v7x: ~2x MXU rate and
        # halved HBM/VMEM bytes; f32 accumulation kept in every matmul).  The
        # default keeps f32 so the reference check stays tight.
        self.mxu_dtype = mxu_dtype

        ks = jax.random.split(key, 6)
        bound = 1.0 / math.sqrt(embedding_size)

        def u(k, shape):
            return jax.random.uniform(k, shape, jnp.float32, -bound, bound)

        # Weights stored pre-transposed (E, H): y = x @ W + b == torch Linear.
        wq, wk, wv = (u(ks[i], (embedding_size, hidden_size)) for i in range(3))
        bq, bk, bv = (u(ks[3 + i], (hidden_size,)) for i in range(3))
        self.w_qkv = jnp.stack([wq, wk, wv], axis=0)               # (3, E, H)
        self.b_qkv = jnp.stack([bq, bk, bv], axis=0)[:, None, :]   # (3, 1, H)

        # Fold the 1/sqrt(head_size) attention scale into the Q projection at
        # init -> no per-element scale in the attention kernel, zero runtime cost.
        inv_scale = 1.0 / math.sqrt(self.head_size)
        self.w_qkv_k = self.w_qkv.at[0].multiply(inv_scale)
        self.b_qkv_k = self.b_qkv.at[0].multiply(inv_scale)

    def __call__(self, inputs, attention_mask):
        xq, xk, xv = inputs
        B, S, E = xq.shape
        HD = self.hidden_size

        # BERT-style key-padding mask only: broadcastable to (B, 1, 1, S) with
        # singleton head and query axes, kept tiny as (B, 1, S).
        am = jnp.asarray(attention_mask)
        assert (am.ndim == 4 and am.shape[1] == 1 and am.shape[2] == 1
                and am.shape[0] in (1, B) and am.shape[3] in (1, S)), (
            "attention_mask must be a BERT-style additive key mask "
            "broadcastable to (B, 1, 1, S)")
        # TODO(synk): per-head or (S, S) causal additive masks would need a
        # (tq, tkv)-tiled mask BlockSpec in the attention kernel.
        mask = jnp.broadcast_to(am, (B, 1, 1, S)).reshape(B, 1, S)
        mask = mask.astype(jnp.float32)

        def prep(x):
            x = x.reshape(B * S, E)
            return x if self.mxu_dtype is None else x.astype(self.mxu_dtype)

        # No (3, B*S, E) HBM stack in either path; for self-attention the single
        # shared activation tile is read once and reused for all three matmuls.
        if (xq is xk) and (xk is xv):
            xs = [prep(xq)]
        else:
            xs = [prep(xq), prep(xk), prep(xv)]

        w = self.w_qkv_k
        if self.mxu_dtype is not None:
            w = w.astype(self.mxu_dtype)

        q, k, v = qkv_projection(xs, w, self.b_qkv_k)      # each (B*S, HD)
        q = q.reshape(B, S, HD)
        k = k.reshape(B, S, HD)
        v = v.reshape(B, S, HD)

        # Packed layout: the attention output is already the merged
        # (B, S, num_heads * head_size) context layer -- no transposes needed.
        ctx = attention(q, k, v, mask, self.num_heads, self.head_size)
        return ctx.astype(jnp.float32)


# ----------------------------------------------------------------------------
# Pure-JAX reference (mirrors the torch forward for correctness check)
# ----------------------------------------------------------------------------
def reference_forward(mha, inputs, attention_mask):
    B, S, _ = inputs[0].shape

    def lin(x, w, b):
        return x @ w + b

    def split(x):
        return x.reshape(B, S, mha.num_heads, mha.head_size).transpose(0, 2, 1, 3)

    q = split(lin(inputs[0], mha.w_qkv[0], mha.b_qkv[0, 0]))
    k = split(lin(inputs[1], mha.w_qkv[1], mha.b_qkv[1, 0]))
    v = split(lin(inputs[2], mha.w_qkv[2], mha.b_qkv[2, 0]))
    scores = jnp.einsum("bhqd,bhkd->bhqk", q, k) / math.sqrt(mha.head_size)
    scores = scores + attention_mask
    probs = jax.nn.softmax(scores, axis=-1)
    ctx = jnp.einsum("bhqk,bhkd->bhqd", probs, v)
    return ctx.transpose(0, 2, 1, 3).reshape(B, S, mha.num_heads * mha.head_size)


if __name__ == "__main__":
    # small config consistent with the module
    batch, seq = 2, 8
    embedding_size, hidden_size, num_heads = 32, 32, 4

    key = jax.random.PRNGKey(0)
    k_param, k_q, k_k, k_v, k_mask = jax.random.split(key, 5)

    mha = MultiHeadAttentionPallas(embedding_size, hidden_size, num_heads, k_param)

    xq = jax.random.normal(k_q, (batch, seq, embedding_size), jnp.float32)
    xk = jax.random.normal(k_k, (batch, seq, embedding_size), jnp.float32)
    xv = jax.random.normal(k_v, (batch, seq, embedding_size), jnp.float32)

    # BERT-style additive mask: (B, 1, 1, S), 0 for keep, -10000 for masked
    keep = (jax.random.uniform(k_mask, (batch, 1, 1, seq)) > 0.2).astype(jnp.float32)
    attention_mask = (1.0 - keep) * -10000.0

    out = mha([xq, xk, xv], attention_mask)
    out = jax.block_until_ready(out)

    ref = reference_forward(mha, [xq, xk, xv], attention_mask)
    assert out.shape == (batch, seq, hidden_size)
    # Exact reciprocal in the kernel -> tight f32 tolerance; relax only for bf16 mode.
    tol = 1e-4 if mha.mxu_dtype is None else 3e-2
    assert jnp.allclose(out, ref, atol=tol, rtol=tol), "mismatch vs reference"

    print("KERNEL_OK")
</pallas_src>

<mosaic_0001>
module attributes {stable_mosaic.version = 11 : i64} {
  func.func @_qkv_proj_kernel(%arg0: i32, %arg1: memref<16x32xf32, #tpu.memory_space<vmem>>, %arg2: memref<16x32xf32, #tpu.memory_space<vmem>>, %arg3: memref<16x32xf32, #tpu.memory_space<vmem>>, %arg4: memref<3x32x32xf32, #tpu.memory_space<vmem>>, %arg5: memref<3x1x32xf32, #tpu.memory_space<vmem>>, %arg6: memref<16x32xf32, #tpu.memory_space<vmem>>, %arg7: memref<16x32xf32, #tpu.memory_space<vmem>>, %arg8: memref<16x32xf32, #tpu.memory_space<vmem>>) attributes {dimension_semantics = [#tpu.dimension_semantics<parallel>], iteration_bounds = array<i64: 1>, scalar_prefetch = 0 : i64, scratch_operands = 0 : i64, tpu.core_type = #tpu.core_type<tc>, window_params = [{transform_indices = @transform_0, window_bounds = array<i64: 16, 32>}, {transform_indices = @transform_1, window_bounds = array<i64: 16, 32>}, {transform_indices = @transform_2, window_bounds = array<i64: 16, 32>}, {pipeline_mode = #tpu.pipeline_mode<synchronous>, transform_indices = @transform_3, window_bounds = array<i64: 3, 32, 32>}, {pipeline_mode = #tpu.pipeline_mode<synchronous>, transform_indices = @transform_4, window_bounds = array<i64: 3, 1, 32>}, {transform_indices = @transform_5, window_bounds = array<i64: 16, 32>}, {transform_indices = @transform_6, window_bounds = array<i64: 16, 32>}, {transform_indices = @transform_7, window_bounds = array<i64: 16, 32>}]} {
    %c0 = arith.constant 0 : index
    %c0_0 = arith.constant 0 : index
    %0 = vector.load %arg1[%c0, %c0_0] : memref<16x32xf32, #tpu.memory_space<vmem>>, vector<16x32xf32>
    %c0_1 = arith.constant 0 : index
    %c0_2 = arith.constant 0 : index
    %1 = vector.load %arg2[%c0_1, %c0_2] : memref<16x32xf32, #tpu.memory_space<vmem>>, vector<16x32xf32>
    %c0_3 = arith.constant 0 : index
    %c0_4 = arith.constant 0 : index
    %2 = vector.load %arg3[%c0_3, %c0_4] : memref<16x32xf32, #tpu.memory_space<vmem>>, vector<16x32xf32>
    %c0_5 = arith.constant 0 : index
    %c0_6 = arith.constant 0 : index
    %c0_7 = arith.constant 0 : index
    %3 = vector.load %arg4[%c0_5, %c0_6, %c0_7] : memref<3x32x32xf32, #tpu.memory_space<vmem>>, vector<1x32x32xf32>
    %4 = vector.shape_cast %3 : vector<1x32x32xf32> to vector<32x32xf32>
    %cst = arith.constant dense<0.000000e+00> : vector<16x32xf32>
    %5 = tpu.matmul %0, %4, %cst {dimension_numbers = #tpu.dot_dimension_numbers<[1], [0], [0], [1], [0, 0, 1, 1], [], []>} : vector<16x32xf32>, vector<32x32xf32>, vector<16x32xf32> -> vector<16x32xf32>
    %c0_8 = arith.constant 0 : index
    %c0_9 = arith.constant 0 : index
    %c0_10 = arith.constant 0 : index
    %6 = vector.load %arg5[%c0_8, %c0_9, %c0_10] : memref<3x1x32xf32, #tpu.memory_space<vmem>>, vector<1x1x32xf32>
    %7 = vector.shape_cast %6 : vector<1x1x32xf32> to vector<1x32xf32>
    %8 = vector.broadcast %7 : vector<1x32xf32> to vector<16x32xf32>
    %9 = arith.addf %5, %8 : vector<16x32xf32>
    %c0_11 = arith.constant 0 : index
    %c0_12 = arith.constant 0 : index
    %10 = vector.load %arg6[%c0_11, %c0_12] : memref<16x32xf32, #tpu.memory_space<vmem>>, vector<16x32xf32>
    tpu.vector_store %arg6[%c0_11, %c0_12], %9 {strides = array<i32>} : memref<16x32xf32, #tpu.memory_space<vmem>>, vector<16x32xf32>,
    %c1 = arith.constant 1 : index
    %c0_13 = arith.constant 0 : index
    %c0_14 = arith.constant 0 : index
    %11 = vector.load %arg4[%c1, %c0_13, %c0_14] : memref<3x32x32xf32, #tpu.memory_space<vmem>>, vector<1x32x32xf32>
    %12 = vector.shape_cast %11 : vector<1x32x32xf32> to vector<32x32xf32>
    %cst_15 = arith.constant dense<0.000000e+00> : vector<16x32xf32>
    %13 = tpu.matmul %1, %12, %cst_15 {dimension_numbers = #tpu.dot_dimension_numbers<[1], [0], [0], [1], [0, 0, 1, 1], [], []>} : vector<16x32xf32>, vector<32x32xf32>, vector<16x32xf32> -> vector<16x32xf32>
    %c1_16 = arith.constant 1 : index
    %c0_17 = arith.constant 0 : index
    %c0_18 = arith.constant 0 : index
    %14 = vector.load %arg5[%c1_16, %c0_17, %c0_18] : memref<3x1x32xf32, #tpu.memory_space<vmem>>, vector<1x1x32xf32>
    %15 = vector.shape_cast %14 : vector<1x1x32xf32> to vector<1x32xf32>
    %16 = vector.broadcast %15 : vector<1x32xf32> to vector<16x32xf32>
    %17 = arith.addf %13, %16 : vector<16x32xf32>
    %c0_19 = arith.constant 0 : index
    %c0_20 = arith.constant 0 : index
    %18 = vector.load %arg7[%c0_19, %c0_20] : memref<16x32xf32, #tpu.memory_space<vmem>>, vector<16x32xf32>
    tpu.vector_store %arg7[%c0_19, %c0_20], %17 {strides = array<i32>} : memref<16x32xf32, #tpu.memory_space<vmem>>, vector<16x32xf32>,
    %c2 = arith.constant 2 : index
    %c0_21 = arith.constant 0 : index
    %c0_22 = arith.constant 0 : index
    %19 = vector.load %arg4[%c2, %c0_21, %c0_22] : memref<3x32x32xf32, #tpu.memory_space<vmem>>, vector<1x32x32xf32>
    %20 = vector.shape_cast %19 : vector<1x32x32xf32> to vector<32x32xf32>
    %cst_23 = arith.constant dense<0.000000e+00> : vector<16x32xf32>
    %21 = tpu.matmul %2, %20, %cst_23 {dimension_numbers = #tpu.dot_dimension_numbers<[1], [0], [0], [1], [0, 0, 1, 1], [], []>} : vector<16x32xf32>, vector<32x32xf32>, vector<16x32xf32> -> vector<16x32xf32>
    %c2_24 = arith.constant 2 : index
    %c0_25 = arith.constant 0 : index
    %c0_26 = arith.constant 0 : index
    %22 = vector.load %arg5[%c2_24, %c0_25, %c0_26] : memref<3x1x32xf32, #tpu.memory_space<vmem>>, vector<1x1x32xf32>
    %23 = vector.shape_cast %22 : vector<1x1x32xf32> to vector<1x32xf32>
    %24 = vector.broadcast %23 : vector<1x32xf32> to vector<16x32xf32>
    %25 = arith.addf %21, %24 : vector<16x32xf32>
    %c0_27 = arith.constant 0 : index
    %c0_28 = arith.constant 0 : index
    %26 = vector.load %arg8[%c0_27, %c0_28] : memref<16x32xf32, #tpu.memory_space<vmem>>, vector<16x32xf32>
    tpu.vector_store %arg8[%c0_27, %c0_28], %25 {strides = array<i32>} : memref<16x32xf32, #tpu.memory_space<vmem>>, vector<16x32xf32>,
    return
  }
  func.func @transform_0(%arg0: i32) -> (i32, i32) {
    %c0_i32 = arith.constant 0 : i32
    %c0_i32_0 = arith.constant 0 : i32
    return %arg0, %c0_i32 : i32, i32
  }
  func.func @transform_1(%arg0: i32) -> (i32, i32) {
    %c0_i32 = arith.constant 0 : i32
    %c0_i32_0 = arith.constant 0 : i32
    return %arg0, %c0_i32 : i32, i32
  }
  func.func @transform_2(%arg0: i32) -> (i32, i32) {
    %c0_i32 = arith.constant 0 : i32
    %c0_i32_0 = arith.constant 0 : i32
    return %arg0, %c0_i32 : i32, i32
  }
  func.func @transform_3(%arg0: i32) -> (i32, i32, i32) {
    %c0_i32 = arith.constant 0 : i32
    %c0_i32_0 = arith.constant 0 : i32
    %c0_i32_1 = arith.constant 0 : i32
    %c0_i32_2 = arith.constant 0 : i32
    return %c0_i32, %c0_i32_0, %c0_i32_1 : i32, i32, i32
  }
  func.func @transform_4(%arg0: i32) -> (i32, i32, i32) {
    %c0_i32 = arith.constant 0 : i32
    %c0_i32_0 = arith.constant 0 : i32
    %c0_i32_1 = arith.constant 0 : i32
    %c0_i32_2 = arith.constant 0 : i32
    return %c0_i32, %c0_i32_0, %c0_i32_1 : i32, i32, i32
  }
  func.func @transform_5(%arg0: i32) -> (i32, i32) {
    %c0_i32 = arith.constant 0 : i32
    %c0_i32_0 = arith.constant 0 : i32
    return %arg0, %c0_i32 : i32, i32
  }
  func.func @transform_6(%arg0: i32) -> (i32, i32) {
    %c0_i32 = arith.constant 0 : i32
    %c0_i32_0 = arith.constant 0 : i32
    return %arg0, %c0_i32 : i32, i32
  }
  func.func @transform_7(%arg0: i32) -> (i32, i32) {
    %c0_i32 = arith.constant 0 : i32
    %c0_i32_0 = arith.constant 0 : i32
    return %arg0, %c0_i32 : i32, i32
  }
}

</mosaic_0001>

<llo_original>
// kernel: tpu_custom_call.1
$region0: #{tpu_custom_call.1}
  #allocation0 [shape = 'u32[]', space=smem, size = 0x4, offset = 0x4, fixed_abs, tag = 'smem constant byte address 0x4 - core index']
  #allocation1 [shape = 'u32[72,128]{1,0:T(1,128)}', space=vmem, size = 0x9000, scoped, tag = 'internal scratch']
  %s0 = inlined_call_operand.hbm [shape: f32[16,32], index: 0, kind: input, shape index: {}]
  %s1 = inlined_call_operand.hbm [shape: f32[16,32], index: 1, kind: input, shape index: {}]
  %s2 = inlined_call_operand.hbm [shape: f32[16,32], index: 2, kind: input, shape index: {}]
  %s3 = inlined_call_operand.hbm [shape: f32[3,32,32], index: 3, kind: input, shape index: {}]
  %s4 = inlined_call_operand.vmem [shape: f32[3,1,32], index: 4, kind: input, shape index: {}]
  %s5 = inlined_call_operand.hbm [shape: f32[16,32], index: 5, kind: output, shape index: {0}]
  %s6 = inlined_call_operand.hbm [shape: f32[16,32], index: 6, kind: output, shape index: {1}]
  %s7 = inlined_call_operand.hbm [shape: f32[16,32], index: 7, kind: output, shape index: {2}]
  %8 = xla_tuple %s5, %s6, %s7
  %s9 = sld [smem:[#allocation0]]
  $region62: #{tpu_custom_call.1} parent=0
    _
  %s11 = ssub.s32 1, %s9
  %s12 = scalar_select 0, %s11, %s9
  $region1: #{tpu_custom_call.1} parent=0
    #allocation2 [shape = 'u8[8192]{0}', space=vmem, size = 0x2000, scoped, tag = 'input window, operand 0, single buffered']
    #allocation3 [shape = 's32[1]{0}', space=sflag, size = 0x4, scoped, tag = 'scoped memory for tpu_custom_call.1']
    #allocation4 [shape = 's32[1]{0}', space=sflag, size = 0x4, scoped, tag = 'scoped memory for tpu_custom_call.1']
    #allocation5 [shape = 'u8[8192]{0}', space=vmem, size = 0x2000, scoped, tag = 'input window, operand 1, single buffered']
    #allocation6 [shape = 's32[1]{0}', space=sflag, size = 0x4, scoped, tag = 'scoped memory for tpu_custom_call.1']
    #allocation7 [shape = 'u8[8192]{0}', space=vmem, size = 0x2000, scoped, tag = 'input window, operand 2, single buffered']
    #allocation8 [shape = 'u8[49152]{0}', space=vmem, size = 0xc000, scoped, tag = 'input window, operand 3, single buffered']
    #allocation9 [shape = 's32[1]{0}', space=sflag, size = 0x4, scoped, tag = 'scoped memory for tpu_custom_call.1']
    #allocation10 [shape = 'u8[8192]{0}', space=vmem, size = 0x2000, scoped, tag = 'output window, operand 0, single buffered']
    #allocation11 [shape = 'u8[8192]{0}', space=vmem, size = 0x2000, scoped, tag = 'output window, operand 1, single buffered']
    #allocation12 [shape = 's32[1]{0}', space=sflag, size = 0x4, scoped, tag = 'scoped memory for tpu_custom_call.1']
    #allocation13 [shape = 'u8[8192]{0}', space=vmem, size = 0x2000, scoped, tag = 'output window, operand 2, single buffered']
    %13 = vsyncpa [#allocation3], 0
    %14 = vsyncpa [#allocation6], 0
    %15 = vsyncpa [#allocation9], 0
    %16 = vsyncpa [#allocation4], 0
    %17 = vsyncpa [#allocation12], 0
    // Predicated region
    $region2: #{tpu_custom_call.1} parent=1 // pred_check
      _
    $region3: #{tpu_custom_call.1} parent=1 // pred_check_branch
      %19 = sbr.rel (0) target = $region5
    $region4: #{tpu_custom_call.1} parent=1 // pred_region
      %21 = vsyncadd [#allocation3], 0
      %s22 = sshll.u32 %s0, 4
      %s23 = int_to_ptr.hbm [resolvable:$true] %s22
      %s24 = sshll.u32 [#allocation2], 4
      %s25 = int_to_ptr.vmem [resolvable:$true] %s24
      %30 = dma.hbm_to_vmem [thread:$0]  %s23, 256, %s25, [#allocation3], 128, 128, 8
    $region5: #{tpu_custom_call.1} parent=1 // pred_fallthru
      _
    // Predicated region
    $region6: #{tpu_custom_call.1} parent=1 // pred_check
      _
    $region7: #{tpu_custom_call.1} parent=1 // pred_check_branch
      %32 = sbr.rel (0) target = $region9
    $region8: #{tpu_custom_call.1} parent=1 // pred_region
      %34 = vsyncadd [#allocation6], 0
      %s35 = sshll.u32 %s1, 4
      %s36 = int_to_ptr.hbm [resolvable:$true] %s35
      %s37 = sshll.u32 [#allocation5], 4
      %s38 = int_to_ptr.vmem [resolvable:$true] %s37
      %43 = dma.hbm_to_vmem [thread:$0]  %s36, 256, %s38, [#allocation6], 128, 128, 8
    $region9: #{tpu_custom_call.1} parent=1 // pred_fallthru
      _
    // Predicated region
    $region10: #{tpu_custom_call.1} parent=1 // pred_check
      _
    $region11: #{tpu_custom_call.1} parent=1 // pred_check_branch
      %45 = sbr.rel (0) target = $region13
    $region12: #{tpu_custom_call.1} parent=1 // pred_region
      %47 = vsyncadd [#allocation6], 0
      %s48 = sshll.u32 %s2, 4
      %s49 = int_to_ptr.hbm [resolvable:$true] %s48
      %s50 = sshll.u32 [#allocation7], 4
      %s51 = int_to_ptr.vmem [resolvable:$true] %s50
      %56 = dma.hbm_to_vmem [thread:$0]  %s49, 256, %s51, [#allocation6], 128, 128, 8
    $region13: #{tpu_custom_call.1} parent=1 // pred_fallthru
      _
    // Predicated region
    $region14: #{tpu_custom_call.1} parent=1 // pred_check
      _
    $region15: #{tpu_custom_call.1} parent=1 // pred_check_branch
      %58 = sbr.rel (0) target = $region17
    $region16: #{tpu_custom_call.1} parent=1 // pred_region
      %60 = vsyncadd [#allocation9], 0
      %s61 = sshll.u32 %s3, 4
      %s62 = int_to_ptr.hbm [resolvable:$true] %s61
      %s63 = sshll.u32 [#allocation8], 4
      %s64 = int_to_ptr.vmem [resolvable:$true] %s63
      %69 = dma.hbm_to_vmem [thread:$0]  %s62, 1536, %s64, [#allocation9], 128, 128, 8
    $region17: #{tpu_custom_call.1} parent=1 // pred_fallthru
      _
    // Predicated region
    $region18: #{tpu_custom_call.1} parent=1 // pred_check
      _
    $region19: #{tpu_custom_call.1} parent=1 // pred_check_branch
      %71 = sbr.rel (0) target = $region21
    $region20: #{tpu_custom_call.1} parent=1 // pred_region
      _
    $region21: #{tpu_custom_call.1} parent=1 // pred_fallthru
      _
    // Predicated region
    $region22: #{tpu_custom_call.1} parent=1 // pred_check
      _
    $region23: #{tpu_custom_call.1} parent=1 // pred_check_branch
      %73 = sbr.rel (0) target = $region25
    $region24: #{tpu_custom_call.1} parent=1 // pred_region
      %75 = dma.done [#allocation3], 256
    $region25: #{tpu_custom_call.1} parent=1 // pred_fallthru
      _
    // Predicated region
    $region26: #{tpu_custom_call.1} parent=1 // pred_check
      _
    $region27: #{tpu_custom_call.1} parent=1 // pred_check_branch
      %77 = sbr.rel (0) target = $region29
    $region28: #{tpu_custom_call.1} parent=1 // pred_region
      %79 = dma.done [#allocation6], 256
    $region29: #{tpu_custom_call.1} parent=1 // pred_fallthru
      _
    // Predicated region
    $region30: #{tpu_custom_call.1} parent=1 // pred_check
      _
    $region31: #{tpu_custom_call.1} parent=1 // pred_check_branch
      %81 = sbr.rel (0) target = $region33
    $region32: #{tpu_custom_call.1} parent=1 // pred_region
      %83 = dma.done [#allocation6], 256
    $region33: #{tpu_custom_call.1} parent=1 // pred_fallthru
      _
    // Predicated region
    $region34: #{tpu_custom_call.1} parent=1 // pred_check
      _
    $region35: #{tpu_custom_call.1} parent=1 // pred_check_branch
      %85 = sbr.rel (0) target = $region37
    $region36: #{tpu_custom_call.1} parent=1 // pred_region
      %87 = dma.done [#allocation9], 1536
    $region37: #{tpu_custom_call.1} parent=1 // pred_fallthru
      _
    %v88 = vld [vmem:[#allocation2] sm:$0xff]
    %v89 = vld [vmem:[#allocation2 + $0x8] sm:$0xff]
    %v90 = vld [vmem:[#allocation5] sm:$0xff]
    %v91 = vld [vmem:[#allocation5 + $0x8] sm:$0xff]
    %v92 = vld [vmem:[#allocation7] sm:$0xff]
    %v93 = vld [vmem:[#allocation7 + $0x8] sm:$0xff]
    %v94 = vld [vmem:[#allocation8] sm:$0xff]
    %v95 = vld [vmem:[#allocation8 + $0x8] sm:$0xff]
    %v96 = vld [vmem:[#allocation8 + $0x10] sm:$0xff]
    %v97 = vld [vmem:[#allocation8 + $0x18] sm:$0xff]
    %v98 = vld [vmem:[%s4] sm:$0x1]
    %v100 = vperm.slane %v98, 0
    %vm102 = vcmask 261120
    %v104 = vsel %vm102, %v88, 0
    %v107 = vsel %vm102, %v89, 0
    %109 = vmatpush.msra.mxu0 0.0
    %110 = vmatpush.msra.mxu0 0.0
    %111 = vmatpush.msra.mxu0 0.0
    %112 = vmatpush.msra.mxu0 0.0
    %113 = vmatpush.msra.mxu0 0.0
    %114 = vmatpush.msra.mxu0 0.0
    %115 = vmatpush.msra.mxu0 0.0
    %116 = vmatpush.msra.mxu0 0.0
    %117 = vmatpush.msra.mxu0 0.0
    %118 = vmatpush.msra.mxu0 0.0
    %119 = vmatpush.msra.mxu0 0.0
    %120 = vmatpush.msra.mxu0 0.0
    %121 = vmatpush.msra.mxu0 %v97
    %122 = vmatpush.msra.mxu0 %v96
    %123 = vmatpush.msra.mxu0 %v95
    %124 = vmatpush.msra.mxu0 %v94
    %125 = vmatmul.f32.gmra.mxu0 %v104
    %v126 = vpop.f32.mrf.mxu0
    %v127 = vadd.f32 %v100, %v126
    %128 = vmatmul.f32.gmra.mxu0 %v107
    %v129 = vpop.f32.mrf.mxu0
    %v130 = vadd.f32 %v100, %v129
    %131 = vdwg.mxu0
    %132 = vst.msk [vmem:[#allocation10] sm:$0xff] %vm102, %v127
    %133 = vst.msk [vmem:[#allocation10 + $0x8] sm:$0xff] %vm102, %v130
    %s134 = scalar_lea.vmem [#allocation8], 32
    %v135 = vld [vmem:[%s134] sm:$0xff]
    %v136 = vld [vmem:[%s134 + $0x8] sm:$0xff]
    %v137 = vld [vmem:[%s134 + $0x10] sm:$0xff]
    %v138 = vld [vmem:[%s134 + $0x18] sm:$0xff]
    %s139 = scalar_lea.vmem %s4, 1
    %v140 = vld [vmem:[%s139] sm:$0x1]
    %v142 = vperm.slane %v140, 0
    %v145 = vsel %vm102, %v90, 0
    %v148 = vsel %vm102, %v91, 0
    %150 = vmatpush.msra.mxu0 0.0
    %151 = vmatpush.msra.mxu0 0.0
    %152 = vmatpush.msra.mxu0 0.0
    %153 = vmatpush.msra.mxu0 0.0
    %154 = vmatpush.msra.mxu0 0.0
    %155 = vmatpush.msra.mxu0 0.0
    %156 = vmatpush.msra.mxu0 0.0
    %157 = vmatpush.msra.mxu0 0.0
    %158 = vmatpush.msra.mxu0 0.0
    %159 = vmatpush.msra.mxu0 0.0
    %160 = vmatpush.msra.mxu0 0.0
    %161 = vmatpush.msra.mxu0 0.0
    %162 = vmatpush.msra.mxu0 %v138
    %163 = vmatpush.msra.mxu0 %v137
    %164 = vmatpush.msra.mxu0 %v136
    %165 = vmatpush.msra.mxu0 %v135
    %166 = vmatmul.f32.gmra.mxu0 %v145
    %v167 = vpop.f32.mrf.mxu0
    %v168 = vadd.f32 %v142, %v167
    %169 = vmatmul.f32.gmra.mxu0 %v148
    %v170 = vpop.f32.mrf.mxu0
    %v171 = vadd.f32 %v142, %v170
    %172 = vdwg.mxu0
    %173 = vst.msk [vmem:[#allocation11] sm:$0xff] %vm102, %v168
    %174 = vst.msk [vmem:[#allocation11 + $0x8] sm:$0xff] %vm102, %v171
    %s175 = scalar_lea.vmem [#allocation8], 64
    %v176 = vld [vmem:[%s175] sm:$0xff]
    %v177 = vld [vmem:[%s175 + $0x8] sm:$0xff]
    %v178 = vld [vmem:[%s175 + $0x10] sm:$0xff]
    %v179 = vld [vmem:[%s175 + $0x18] sm:$0xff]
    %s180 = scalar_lea.vmem %s4, 2
    %v181 = vld [vmem:[%s180] sm:$0x1]
    %v183 = vperm.slane %v181, 0
    %v186 = vsel %vm102, %v92, 0
    %v189 = vsel %vm102, %v93, 0
    %191 = vmatpush.msra.mxu0 0.0
    %192 = vmatpush.msra.mxu0 0.0
    %193 = vmatpush.msra.mxu0 0.0
    %194 = vmatpush.msra.mxu0 0.0
    %195 = vmatpush.msra.mxu0 0.0
    %196 = vmatpush.msra.mxu0 0.0
    %197 = vmatpush.msra.mxu0 0.0
    %198 = vmatpush.msra.mxu0 0.0
    %199 = vmatpush.msra.mxu0 0.0
    %200 = vmatpush.msra.mxu0 0.0
    %201 = vmatpush.msra.mxu0 0.0
    %202 = vmatpush.msra.mxu0 0.0
    %203 = vmatpush.msra.mxu0 %v179
    %204 = vmatpush.msra.mxu0 %v178
    %205 = vmatpush.msra.mxu0 %v177
    %206 = vmatpush.msra.mxu0 %v176
    %207 = vmatmul.f32.gmra.mxu0 %v186
    %v208 = vpop.f32.mrf.mxu0
    %v209 = vadd.f32 %v183, %v208
    %210 = vmatmul.f32.gmra.mxu0 %v189
    %v211 = vpop.f32.mrf.mxu0
    %v212 = vadd.f32 %v183, %v211
    %213 = vdwg.mxu0
    %214 = vst.msk [vmem:[#allocation13] sm:$0xff] %vm102, %v209
    %215 = vst.msk [vmem:[#allocation13 + $0x8] sm:$0xff] %vm102, %v212
    // Predicated region
    $region38: #{tpu_custom_call.1} parent=1 // pred_check
      _
    $region39: #{tpu_custom_call.1} parent=1 // pred_check_branch
      %217 = sbr.rel (0) target = $region41
    $region40: #{tpu_custom_call.1} parent=1 // pred_region
      %219 = vsyncadd [#allocation4], 0
      %s220 = sshll.u32 [#allocation10], 4
      %s221 = int_to_ptr.vmem [resolvable:$true] %s220
      %s222 = sshll.u32 %s5, 4
      %s223 = int_to_ptr.hbm [resolvable:$true] %s222
      %228 = dma.vmem_to_hbm [thread:$0]  %s221, 256, %s223, [#allocation4], 128, 128, 8
    $region41: #{tpu_custom_call.1} parent=1 // pred_fallthru
      _
    // Predicated region
    $region42: #{tpu_custom_call.1} parent=1 // pred_check
      _
    $region43: #{tpu_custom_call.1} parent=1 // pred_check_branch
      %230 = sbr.rel (0) target = $region45
    $region44: #{tpu_custom_call.1} parent=1 // pred_region
      %232 = vsyncadd [#allocation12], 0
      %s233 = sshll.u32 [#allocation11], 4
      %s234 = int_to_ptr.vmem [resolvable:$true] %s233
      %s235 = sshll.u32 %s6, 4
      %s236 = int_to_ptr.hbm [resolvable:$true] %s235
      %241 = dma.vmem_to_hbm [thread:$0]  %s234, 256, %s236, [#allocation12], 128, 128, 8
    $region45: #{tpu_custom_call.1} parent=1 // pred_fallthru
      _
    // Predicated region
    $region46: #{tpu_custom_call.1} parent=1 // pred_check
      _
    $region47: #{tpu_custom_call.1} parent=1 // pred_check_branch
      %243 = sbr.rel (0) target = $region49
    $region48: #{tpu_custom_call.1} parent=1 // pred_region
      %245 = vsyncadd [#allocation12], 0
      %s246 = sshll.u32 [#allocation13], 4
      %s247 = int_to_ptr.vmem [resolvable:$true] %s246
      %s248 = sshll.u32 %s7, 4
      %s249 = int_to_ptr.hbm [resolvable:$true] %s248
      %254 = dma.vmem_to_hbm [thread:$0]  %s247, 256, %s249, [#allocation12], 128, 128, 8
    $region49: #{tpu_custom_call.1} parent=1 // pred_fallthru
      _
    // Predicated region
    $region50: #{tpu_custom_call.1} parent=1 // pred_check
      _
    $region51: #{tpu_custom_call.1} parent=1 // pred_check_branch
      %256 = sbr.rel (0) target = $region53
    $region52: #{tpu_custom_call.1} parent=1 // pred_region
      %258 = dma.done [#allocation4], 256
    $region53: #{tpu_custom_call.1} parent=1 // pred_fallthru
      _
    // Predicated region
    $region54: #{tpu_custom_call.1} parent=1 // pred_check
      _
    $region55: #{tpu_custom_call.1} parent=1 // pred_check_branch
      %260 = sbr.rel (0) target = $region57
    $region56: #{tpu_custom_call.1} parent=1 // pred_region
      %262 = dma.done [#allocation12], 256
    $region57: #{tpu_custom_call.1} parent=1 // pred_fallthru
      _
    // Predicated region
    $region58: #{tpu_custom_call.1} parent=1 // pred_check
      _
    $region59: #{tpu_custom_call.1} parent=1 // pred_check_branch
      %264 = sbr.rel (0) target = $region61
    $region60: #{tpu_custom_call.1} parent=1 // pred_region
      %266 = dma.done [#allocation12], 256
    $region61: #{tpu_custom_call.1} parent=1 // pred_fallthru
      _
    %267 = vsyncpa [#allocation3], 1
    %268 = vsyncpa [#allocation6], 1
    %269 = vsyncpa [#allocation9], 1
    %270 = vsyncpa [#allocation4], 1
    %271 = vsyncpa [#allocation12], 1

</llo_original>
